<compile_context>
chip_gen: v7x
topology: tpu7x:2x2x1
jax: 0.10.0
libtpu: 0.0.40
codegen_flags: <defaults>
</compile_context>

<pallas_src>
import jax
import jax.numpy as jnp
from jax.experimental import pallas as pl
from jax.experimental.pallas import tpu as pltpu


def _round_up(x, m):
    return ((x + m - 1) // m) * m


def _compose_kernel(x_ref, scale_ref, shift_ref, o_ref):
    # x_ref:     (TM, TC)      block of the flattened image
    # scale_ref: (NC_pad, 1)   folded per-row scale (resident, fetched once)
    # shift_ref: (NC_pad, 1)   folded per-row shift (resident, fetched once)
    tm = x_ref.shape[0]
    row0 = pl.multiple_of(pl.program_id(0) * tm, tm)
    sc = scale_ref[pl.ds(row0, tm), :]          # (TM, 1)
    sh = shift_ref[pl.ds(row0, tm), :]          # (TM, 1)
    o_ref[...] = (x_ref[...].astype(jnp.float32) * sc + sh).astype(o_ref.dtype)


def ks_compose(img, scales, shifts, *, target_block_bytes=2 * 1024 * 1024):
    """Apply a composition of per-channel affine transforms to `img`.

    img:    (N, C, H, W) float32
    scales: (K, C) float32   -- per-transform, per-channel scale
    shifts: (K, C) float32   -- per-transform, per-channel shift
    """
    n, c, h, w = img.shape
    k = scales.shape[0]
    nc, hw = n * c, h * w

    # --- Fold the K affines (in application order) into one scale/shift per
    # channel. This is done on tiny (C,) arrays, not the big tensor.
    scale_tot = jnp.ones((c,), jnp.float32)
    shift_tot = jnp.zeros((c,), jnp.float32)
    for kk in range(k):
        scale_tot = scale_tot * scales[kk]
        shift_tot = shift_tot * scales[kk] + shifts[kk]

    # Per-row params: row r of img.reshape(nc, hw) is channel r % C.
    scale_rows = jnp.tile(scale_tot, (n,)).reshape(nc, 1)
    shift_rows = jnp.tile(shift_tot, (n,)).reshape(nc, 1)

    # --- Lane-dense, generation-agnostic tiling.
    hw128 = _round_up(hw, 128)
    tile_cols = min(hw128, 2048)                 # large multiple of 128
    hw_pad = _round_up(hw, tile_cols)

    nc8 = _round_up(nc, 8)
    rows_for_budget = max(8, (target_block_bytes // (tile_cols * 4)) // 8 * 8)
    tile_rows = min(nc8, rows_for_budget)        # multiple of 8
    nc_pad = _round_up(nc, tile_rows)

    x2d = img.reshape(nc, hw)
    if (nc_pad, hw_pad) != (nc, hw):
        x2d = jnp.pad(x2d, ((0, nc_pad - nc), (0, hw_pad - hw)))
        scale_rows = jnp.pad(scale_rows, ((0, nc_pad - nc), (0, 0)),
                             constant_values=1.0)
        shift_rows = jnp.pad(shift_rows, ((0, nc_pad - nc), (0, 0)))

    grid = (nc_pad // tile_rows, hw_pad // tile_cols)

    out2d = pl.pallas_call(
        _compose_kernel,
        out_shape=jax.ShapeDtypeStruct((nc_pad, hw_pad), img.dtype),
        grid_spec=pltpu.PrefetchScalarGridSpec(
            num_scalar_prefetch=0,
            grid=grid,
            in_specs=[
                pl.BlockSpec((tile_rows, tile_cols), lambda i, j: (i, j)),
                pl.BlockSpec((nc_pad, 1), lambda i, j: (0, 0)),
                pl.BlockSpec((nc_pad, 1), lambda i, j: (0, 0)),
            ],
            out_specs=pl.BlockSpec((tile_rows, tile_cols), lambda i, j: (i, j)),
        ),
        compiler_params=pltpu.CompilerParams(
            dimension_semantics=("parallel", "parallel"),
            vmem_limit_bytes=32 * 1024 * 1024,
        ),
        cost_estimate=pl.CostEstimate(
            flops=2 * nc * hw,
            transcendentals=0,
            bytes_accessed=2 * nc * hw * img.dtype.itemsize,
        ),
    )(x2d, scale_rows, shift_rows)

    return out2d[:nc, :hw].reshape(n, c, h, w)


def ks_compose_ref(img, scales, shifts):
    """Pure-JAX reference: apply the K affines sequentially (unfolded)."""
    out = img
    for kk in range(scales.shape[0]):
        out = out * scales[kk][None, :, None, None] \
              + shifts[kk][None, :, None, None]
    return out


if __name__ == "__main__":
    key = jax.random.PRNGKey(0)
    k_img, k_scale, k_shift = jax.random.split(key, 3)

    N, C, H, W = 2, 4, 16, 16
    K = 3  # number of composed transforms

    img = jax.random.normal(k_img, (N, C, H, W), dtype=jnp.float32)
    # Deterministic parameter init for each transform in the composition.
    scales = 1.0 + 0.1 * jax.random.normal(k_scale, (K, C), dtype=jnp.float32)
    shifts = 0.05 * jax.random.normal(k_shift, (K, C), dtype=jnp.float32)

    out = ks_compose(img, scales, shifts)
    out = jax.block_until_ready(out)

    ref = ks_compose_ref(img, scales, shifts)
    assert out.shape == (N, C, H, W)
    assert jnp.allclose(out, ref, atol=1e-5, rtol=1e-5)

    print("KERNEL_OK")
</pallas_src>

<mosaic_0001>
module attributes {stable_mosaic.version = 11 : i64} {
  func.func @_compose_kernel(%arg0: i32, %arg1: i32, %arg2: memref<8x256xf32, #tpu.memory_space<vmem>>, %arg3: memref<8x1xf32, #tpu.memory_space<vmem>>, %arg4: memref<8x1xf32, #tpu.memory_space<vmem>>, %arg5: memref<8x256xf32, #tpu.memory_space<vmem>>) attributes {dimension_semantics = [#tpu.dimension_semantics<parallel>, #tpu.dimension_semantics<parallel>], iteration_bounds = array<i64: 1, 1>, scalar_prefetch = 0 : i64, scratch_operands = 0 : i64, tpu.core_type = #tpu.core_type<tc>, window_params = [{transform_indices = @transform_0, window_bounds = array<i64: 8, 256>}, {pipeline_mode = #tpu.pipeline_mode<synchronous>, transform_indices = @transform_1, window_bounds = array<i64: 8, 1>}, {pipeline_mode = #tpu.pipeline_mode<synchronous>, transform_indices = @transform_2, window_bounds = array<i64: 8, 1>}, {transform_indices = @transform_3, window_bounds = array<i64: 8, 256>}]} {
    %c8_i32 = arith.constant 8 : i32
    %0 = arith.muli %arg0, %c8_i32 : i32
    %1 = tpu.assume_multiple %0, 8 : i32
    %2 = arith.index_cast %1 : i32 to index
    %c0 = arith.constant 0 : index
    %3 = vector.load %arg3[%2, %c0] : memref<8x1xf32, #tpu.memory_space<vmem>>, vector<8x1xf32>
    %4 = arith.index_cast %1 : i32 to index
    %c0_0 = arith.constant 0 : index
    %5 = vector.load %arg4[%4, %c0_0] : memref<8x1xf32, #tpu.memory_space<vmem>>, vector<8x1xf32>
    %c0_1 = arith.constant 0 : index
    %c0_2 = arith.constant 0 : index
    %6 = vector.load %arg2[%c0_1, %c0_2] : memref<8x256xf32, #tpu.memory_space<vmem>>, vector<8x256xf32>
    %7 = vector.broadcast %3 : vector<8x1xf32> to vector<8x256xf32>
    %8 = arith.mulf %6, %7 : vector<8x256xf32>
    %9 = vector.broadcast %5 : vector<8x1xf32> to vector<8x256xf32>
    %10 = arith.addf %8, %9 : vector<8x256xf32>
    %c0_3 = arith.constant 0 : index
    %c0_4 = arith.constant 0 : index
    %11 = vector.load %arg5[%c0_3, %c0_4] : memref<8x256xf32, #tpu.memory_space<vmem>>, vector<8x256xf32>
    tpu.vector_store %arg5[%c0_3, %c0_4], %10 {strides = array<i32>} : memref<8x256xf32, #tpu.memory_space<vmem>>, vector<8x256xf32>,
    return
  }
  func.func @transform_0(%arg0: i32, %arg1: i32) -> (i32, i32) {
    %c0_i32 = arith.constant 0 : i32
    return %arg0, %arg1 : i32, i32
  }
  func.func @transform_1(%arg0: i32, %arg1: i32) -> (i32, i32) {
    %c0_i32 = arith.constant 0 : i32
    %c0_i32_0 = arith.constant 0 : i32
    %c0_i32_1 = arith.constant 0 : i32
    return %c0_i32, %c0_i32_0 : i32, i32
  }
  func.func @transform_2(%arg0: i32, %arg1: i32) -> (i32, i32) {
    %c0_i32 = arith.constant 0 : i32
    %c0_i32_0 = arith.constant 0 : i32
    %c0_i32_1 = arith.constant 0 : i32
    return %c0_i32, %c0_i32_0 : i32, i32
  }
  func.func @transform_3(%arg0: i32, %arg1: i32) -> (i32, i32) {
    %c0_i32 = arith.constant 0 : i32
    return %arg0, %arg1 : i32, i32
  }
}

</mosaic_0001>

<llo_original>
// kernel: tpu_custom_call.1
$region0: #{tpu_custom_call.1}
  #allocation0 [shape = 'u32[]', space=smem, size = 0x4, offset = 0x4, fixed_abs, tag = 'smem constant byte address 0x4 - core index']
  #allocation1 [shape = 'u32[144,128]{1,0:T(1,128)}', space=vmem, size = 0x12000, scoped, tag = 'internal scratch']
  %s0 = inlined_call_operand.vmem [shape: f32[8,256], index: 0, kind: input, shape index: {}]
  %s1 = inlined_call_operand.vmem [shape: f32[8,1], index: 1, kind: input, shape index: {}]
  %s2 = inlined_call_operand.vmem [shape: f32[8,1], index: 2, kind: input, shape index: {}]
  %s3 = inlined_call_operand.hbm [shape: f32[8,256], index: 3, kind: output, shape index: {}]
  %s4 = sld [smem:[#allocation0]]
  $region22: #{tpu_custom_call.1} parent=0
    _
  %s6 = ssub.s32 1, %s4
  %s7 = scalar_select 0, %s6, %s4
  $region1: #{tpu_custom_call.1} parent=0
    #allocation2 [shape = 'u8[8192]{0}', space=vmem, size = 0x2000, scoped, tag = 'output window, operand 0, single buffered']
    #allocation3 [shape = 's32[1]{0}', space=sflag, size = 0x4, scoped, tag = 'scoped memory for tpu_custom_call.1']
    %8 = vsyncpa [#allocation3], 0
    // Predicated region
    $region2: #{tpu_custom_call.1} parent=1 // pred_check
      _
    $region3: #{tpu_custom_call.1} parent=1 // pred_check_branch
      %10 = sbr.rel (0) target = $region5
    $region4: #{tpu_custom_call.1} parent=1 // pred_region
      _
    $region5: #{tpu_custom_call.1} parent=1 // pred_fallthru
      _
    // Predicated region
    $region6: #{tpu_custom_call.1} parent=1 // pred_check
      _
    $region7: #{tpu_custom_call.1} parent=1 // pred_check_branch
      %12 = sbr.rel (0) target = $region9
    $region8: #{tpu_custom_call.1} parent=1 // pred_region
      _
    $region9: #{tpu_custom_call.1} parent=1 // pred_fallthru
      _
    // Predicated region
    $region10: #{tpu_custom_call.1} parent=1 // pred_check
      _
    $region11: #{tpu_custom_call.1} parent=1 // pred_check_branch
      %14 = sbr.rel (0) target = $region13
    $region12: #{tpu_custom_call.1} parent=1 // pred_region
      _
    $region13: #{tpu_custom_call.1} parent=1 // pred_fallthru
      _
    %s15 = smul.u32 0, 8
    %s16 = scalar_lea.vmem %s1, %s15
    %v17 = vld [vmem:[%s16] sm:$0xff]
    %s18 = scalar_lea.vmem %s2, %s15
    %v19 = vld [vmem:[%s18] sm:$0xff]
    %v20 = vld [vmem:[%s0] sm:$0xff]
    %v21 = vld [vmem:[%s0 + $0x8] sm:$0xff]
    %23 = vset.pattern.permute.xlu0 0
    %24 = vperm.xlu0 %23, %v17
    %v25 = vpop.permute.xlu0 %24
    %v27 = vmul.f32 %v20, %v25
    %v28 = vmul.f32 %v21, %v25
    %30 = vset.pattern.permute.xlu0 0
    %31 = vperm.xlu0 %30, %v19
    %v32 = vpop.permute.xlu0 %31
    %v34 = vadd.f32 %v27, %v32
    %v35 = vadd.f32 %v28, %v32
    %36 = vst [vmem:[#allocation2] sm:$0xff] %v34
    %37 = vst [vmem:[#allocation2 + $0x8] sm:$0xff] %v35
    // Predicated region
    $region14: #{tpu_custom_call.1} parent=1 // pred_check
      _
    $region15: #{tpu_custom_call.1} parent=1 // pred_check_branch
      %39 = sbr.rel (0) target = $region17
    $region16: #{tpu_custom_call.1} parent=1 // pred_region
      %s41 = ssub.s32 256, 256
      %42 = vsyncadd [#allocation3], %s41
      %s44 = sshll.u32 [#allocation2], 4
      %s45 = int_to_ptr.vmem [resolvable:$true] %s44
      %47 = dma.vmem_to_hbm [thread:$0]  %s45, 256, %s3, [#allocation3]
    $region17: #{tpu_custom_call.1} parent=1 // pred_fallthru
      _
    // Predicated region
    $region18: #{tpu_custom_call.1} parent=1 // pred_check
      _
    $region19: #{tpu_custom_call.1} parent=1 // pred_check_branch
      %49 = sbr.rel (0) target = $region21
    $region20: #{tpu_custom_call.1} parent=1 // pred_region
      %50 = dma.done [#allocation3], 256
    $region21: #{tpu_custom_call.1} parent=1 // pred_fallthru
      _
    %51 = vsyncpa [#allocation3], 1

</llo_original>
